<compile_context>
chip_gen: v7x
topology: tpu7x:2x2x1
jax: 0.10.0
libtpu: 0.0.40
codegen_flags: <defaults>
</compile_context>

<pallas_src>
import functools

import jax
import jax.numpy as jnp
from jax.experimental import pallas as pl
from jax.experimental.pallas import tpu as pltpu


def _decode_kernel(*refs, num_layers, rnn_size):
    """One grid step == one decode time step of the multi-layer LSTM."""
    L, R = num_layers, rnn_size
    f32 = jnp.float32
    if L > 1:
        (x_ref, sg_ref, hc_in_ref, w_x_ref, w_h_ref, w_i_rest_ref,
         y_ref, hc_ref) = refs
    else:
        (x_ref, sg_ref, hc_in_ref, w_x_ref, w_h_ref,
         y_ref, hc_ref) = refs
        w_i_rest_ref = None

    t = pl.program_id(0)

    # The lane-dense state slab lives in the (resident) output buffer across
    # all time steps; initialize it from the input slab on the first step.
    @pl.when(t == 0)
    def _():
        hc_ref[...] = hc_in_ref[...]

    xt = x_ref[0]                       # (B, E)   streamed per step
    hc = hc_ref[...]                    # (B, 2*L*R) resident state slab

    def cell(gates, c_prev):
        # Full-width (B, 4R) activations, slice afterwards.
        s = jax.nn.sigmoid(gates)
        tg = jnp.tanh(gates)
        i = s[:, 0 * R:1 * R]
        f = s[:, 1 * R:2 * R]
        g = tg[:, 2 * R:3 * R]
        o = s[:, 3 * R:4 * R]
        c_new = f * c_prev + i * g
        h_new = o * jnp.tanh(c_new)
        return h_new, c_new

    # ---- layer 0: precomputed static gates + two small per-step dots.
    h_prev = hc[:, 0:R]
    c_prev = hc[:, L * R:(L + 1) * R]
    gates = (sg_ref[...]
             + jnp.dot(xt, w_x_ref[...], preferred_element_type=f32)
             + jnp.dot(h_prev, w_h_ref[0], preferred_element_type=f32))
    h_l, c_l = cell(gates, c_prev)
    new_h, new_c = [h_l], [c_l]

    # ---- layers 1..L-1: two accumulated dots instead of a lane-axis concat.
    # TODO(synk): nn.LSTM inter-layer dropout is identity here (eval mode).
    for l in range(1, L):
        h_prev = hc[:, l * R:(l + 1) * R]
        c_prev = hc[:, (L + l) * R:(L + l + 1) * R]
        gates = (jnp.dot(h_l, w_i_rest_ref[l - 1], preferred_element_type=f32)
                 + jnp.dot(h_prev, w_h_ref[l], preferred_element_type=f32))
        h_l, c_l = cell(gates, c_prev)
        new_h.append(h_l)
        new_c.append(c_l)

    # Per-step output = top layer's new hidden state (nn.LSTM seq output).
    y_ref[0] = h_l
    # One lane-dense (B, 2*L*R) store for the whole new state.
    hc_ref[...] = jnp.concatenate(new_h + new_c, axis=-1)


def _lstm_decode(x_seq, static_gates, hc0, params, *, num_layers, rnn_size):
    """Runs the fused multi-step LSTM decode kernel. x_seq: (T, B, E)."""
    T, B, E = x_seq.shape
    L, R = num_layers, rnn_size
    kernel = functools.partial(_decode_kernel, num_layers=L, rnn_size=R)

    args = [x_seq, static_gates, hc0, params['w_x'], params['w_h']]
    in_specs = [
        pl.BlockSpec((1, B, E), lambda t: (t, 0, 0)),         # streamed xt
        pl.BlockSpec((B, 4 * R), lambda t: (0, 0)),           # resident
        pl.BlockSpec((B, 2 * L * R), lambda t: (0, 0)),       # resident state
        pl.BlockSpec((E, 4 * R), lambda t: (0, 0)),           # resident weights
        pl.BlockSpec((L, R, 4 * R), lambda t: (0, 0, 0)),     # resident weights
    ]
    if L > 1:
        args.append(params['w_i_rest'])
        in_specs.append(pl.BlockSpec((L - 1, R, 4 * R), lambda t: (0, 0, 0)))

    y, hc_new = pl.pallas_call(
        kernel,
        grid=(T,),
        out_shape=(
            jax.ShapeDtypeStruct((T, B, R), jnp.float32),
            jax.ShapeDtypeStruct((B, 2 * L * R), jnp.float32),
        ),
        in_specs=in_specs,
        out_specs=(
            pl.BlockSpec((1, B, R), lambda t: (t, 0, 0)),
            pl.BlockSpec((B, 2 * L * R), lambda t: (0, 0)),
        ),
        input_output_aliases={2: 1},          # donate the state slab
        compiler_params=pltpu.CompilerParams(
            dimension_semantics=("arbitrary",),
            vmem_limit_bytes=32 * 1024 * 1024,
        ),
    )(*args)
    return y, hc_new


def _static_gates(video, event, clip, batch_size, params, feats_type):
    """Step-invariant layer-0 gate contribution, computed once per sequence."""
    feats = []
    if 'V' in feats_type:
        feats.append(jnp.broadcast_to(video[None, :],
                                      (batch_size, video.shape[-1])))
    if 'E' in feats_type:
        feats.append(event)
    if 'C' in feats_type:
        # Matches the PyTorch forward: clip_mask is NOT applied to clip.mean(1).
        feats.append(jnp.mean(clip, axis=1))
    static_x = jnp.concatenate(feats, axis=1).astype(jnp.float32)
    return static_x @ params['w_static']       # (B, 4R)


def _pack_state(h, c):
    L, B, R = h.shape
    return jnp.concatenate(
        [jnp.transpose(h, (1, 0, 2)).reshape(B, L * R),
         jnp.transpose(c, (1, 0, 2)).reshape(B, L * R)], axis=1)


def _unpack_state(hc, L, B, R):
    h = jnp.transpose(hc[:, :L * R].reshape(B, L, R), (1, 0, 2))
    c = jnp.transpose(hc[:, L * R:].reshape(B, L, R), (1, 0, 2))
    return h, c


def allimg_core(xt, video, event, clip, clip_mask, state, params,
                feats_type='VEC'):
    """Single-step forward matching AllImgCore.forward (eval mode)."""
    del clip_mask  # The PyTorch forward never applies it either.
    h, c = state
    L, B, R = h.shape
    sg = _static_gates(video, event, clip, B, params, feats_type)
    hc0 = _pack_state(h, c)
    y, hc_new = _lstm_decode(xt[None].astype(jnp.float32), sg, hc0, params,
                             num_layers=L, rnn_size=R)
    h_new, c_new = _unpack_state(hc_new, L, B, R)
    return y[0], (h_new, c_new)


def allimg_core_decode(x_seq, video, event, clip, clip_mask, state, params,
                       feats_type='VEC'):
    """T decode steps fused into one pallas_call (time loop inside kernel)."""
    del clip_mask
    h, c = state
    L, B, R = h.shape
    sg = _static_gates(video, event, clip, B, params, feats_type)
    hc0 = _pack_state(h, c)
    y, hc_new = _lstm_decode(x_seq.astype(jnp.float32), sg, hc0, params,
                             num_layers=L, rnn_size=R)
    h_new, c_new = _unpack_state(hc_new, L, B, R)
    return y, (h_new, c_new)


def init_params(key, E, Din, R, L):
    """Deterministic init mimicking PyTorch nn.LSTM default uniform init."""
    ks = jax.random.split(key, 2 * L)
    bound = 1.0 / float(R) ** 0.5

    def u(k, shape):
        return jax.random.uniform(k, shape, jnp.float32, -bound, bound)

    W_ih = [u(ks[0], (4 * R, E + Din))]
    W_ih += [u(ks[2 * l], (4 * R, R)) for l in range(1, L)]
    W_hh = [u(ks[2 * l + 1], (4 * R, R)) for l in range(L)]

    params = dict(
        W_ih=W_ih, W_hh=W_hh,
        w_x=W_ih[0][:, :E].T,                              # (E, 4R)
        w_static=W_ih[0][:, E:].T,                         # (Din, 4R)
        w_h=jnp.stack([w.T for w in W_hh], axis=0),        # (L, R, 4R)
    )
    if L > 1:
        params['w_i_rest'] = jnp.stack(
            [W_ih[l].T for l in range(1, L)], axis=0)      # (L-1, R, 4R)
    return params


def reference_forward(xt, video, event, clip, clip_mask, state, params,
                      feats_type='VEC'):
    """Plain-JAX reference mirroring the PyTorch semantics (eval mode)."""
    del clip_mask
    h, c = state
    L, B, R = h.shape
    feats = [xt]
    if 'V' in feats_type:
        feats.append(jnp.broadcast_to(video[None, :], (B, video.shape[-1])))
    if 'E' in feats_type:
        feats.append(event)
    if 'C' in feats_type:
        feats.append(jnp.mean(clip, axis=1))
    x = jnp.concatenate(feats, axis=1)

    h_out, c_out = [], []
    inp = x
    for l in range(L):
        gates = inp @ params['W_ih'][l].T + h[l] @ params['W_hh'][l].T
        i = jax.nn.sigmoid(gates[:, :R])
        f = jax.nn.sigmoid(gates[:, R:2 * R])
        g = jnp.tanh(gates[:, 2 * R:3 * R])
        o = jax.nn.sigmoid(gates[:, 3 * R:])
        cn = f * c[l] + i * g
        hn = o * jnp.tanh(cn)
        h_out.append(hn)
        c_out.append(cn)
        inp = hn  # dropout identity (eval mode)
    h_new = jnp.stack(h_out)
    c_new = jnp.stack(c_out)
    return h_new[-1], (h_new, c_new)


if __name__ == "__main__":
    # B=2 batch, E=16 input encoding, Dv=24 video, De=20 event, Dc=28 clip,
    # A=8 clip slots, R=32 rnn size, L=2 layers, feats_type='VEC' -> Din=72.
    B, E, Dv, De, Dc, A, R, L = 2, 16, 24, 20, 28, 8, 32, 2
    feats_type = 'VEC'
    Din = Dv + De + Dc

    key = jax.random.PRNGKey(0)
    kx, kv, ke, kc, kh, kcc, kp, kseq = jax.random.split(key, 8)
    xt = jax.random.normal(kx, (B, E), jnp.float32)
    video = jax.random.normal(kv, (Dv,), jnp.float32)
    event = jax.random.normal(ke, (B, De), jnp.float32)
    clip = jax.random.normal(kc, (B, A, Dc), jnp.float32)
    clip_mask = jnp.ones((B, A), jnp.float32)
    h = jax.random.normal(kh, (L, B, R), jnp.float32) * 0.1
    c = jax.random.normal(kcc, (L, B, R), jnp.float32) * 0.1
    params = init_params(kp, E, Din, R, L)

    # ---- single-step forward (matches AllImgCore.forward) ----
    out, (h_new, c_new) = allimg_core(
        xt, video, event, clip, clip_mask, (h, c), params, feats_type)
    jax.block_until_ready((out, h_new, c_new))

    ref_out, (ref_h, ref_c) = reference_forward(
        xt, video, event, clip, clip_mask, (h, c), params, feats_type)
    assert jnp.allclose(out, ref_out, atol=1e-4), "output mismatch"
    assert jnp.allclose(h_new, ref_h, atol=1e-4), "h state mismatch"
    assert jnp.allclose(c_new, ref_c, atol=1e-4), "c state mismatch"

    # ---- fused multi-step decode (time loop inside the kernel) ----
    T = 6
    x_seq = jax.random.normal(kseq, (T, B, E), jnp.float32)
    ys, (hT, cT) = allimg_core_decode(
        x_seq, video, event, clip, clip_mask, (h, c), params, feats_type)
    jax.block_until_ready((ys, hT, cT))

    rh, rc = h, c
    for t in range(T):
        ry, (rh, rc) = reference_forward(
            x_seq[t], video, event, clip, clip_mask, (rh, rc), params,
            feats_type)
        assert jnp.allclose(ys[t], ry, atol=1e-4), f"decode output mismatch t={t}"
    assert jnp.allclose(hT, rh, atol=1e-4), "decode h state mismatch"
    assert jnp.allclose(cT, rc, atol=1e-4), "decode c state mismatch"

    print("KERNEL_OK")
</pallas_src>

<mosaic_0001>
module attributes {stable_mosaic.version = 11 : i64} {
  func.func @_decode_kernel(%arg0: i32, %arg1: memref<1x2x16xf32, #tpu.memory_space<vmem>>, %arg2: memref<2x128xf32, #tpu.memory_space<vmem>>, %arg3: memref<2x128xf32, #tpu.memory_space<vmem>>, %arg4: memref<16x128xf32, #tpu.memory_space<vmem>>, %arg5: memref<2x32x128xf32, #tpu.memory_space<vmem>>, %arg6: memref<1x32x128xf32, #tpu.memory_space<vmem>>, %arg7: memref<1x2x32xf32, #tpu.memory_space<vmem>>, %arg8: memref<2x128xf32, #tpu.memory_space<vmem>>) attributes {dimension_semantics = [#tpu.dimension_semantics<arbitrary>], iteration_bounds = array<i64: 1>, scalar_prefetch = 0 : i64, scratch_operands = 0 : i64, tpu.core_type = #tpu.core_type<tc>, window_params = [{transform_indices = @transform_0, window_bounds = array<i64: 1, 2, 16>}, {pipeline_mode = #tpu.pipeline_mode<synchronous>, transform_indices = @transform_1, window_bounds = array<i64: 2, 128>}, {pipeline_mode = #tpu.pipeline_mode<synchronous>, transform_indices = @transform_2, window_bounds = array<i64: 2, 128>}, {pipeline_mode = #tpu.pipeline_mode<synchronous>, transform_indices = @transform_3, window_bounds = array<i64: 16, 128>}, {pipeline_mode = #tpu.pipeline_mode<synchronous>, transform_indices = @transform_4, window_bounds = array<i64: 2, 32, 128>}, {pipeline_mode = #tpu.pipeline_mode<synchronous>, transform_indices = @transform_5, window_bounds = array<i64: 1, 32, 128>}, {transform_indices = @transform_6, window_bounds = array<i64: 1, 2, 32>}, {pipeline_mode = #tpu.pipeline_mode<synchronous>, transform_indices = @transform_7, window_bounds = array<i64: 2, 128>}]} {
    %c0_i32 = arith.constant 0 : i32
    %0 = arith.cmpi eq, %arg0, %c0_i32 : i32
    %1 = arith.extui %0 : i1 to i32
    %c0_i32_0 = arith.constant 0 : i32
    %2 = arith.cmpi ne, %1, %c0_i32_0 : i32
    scf.if %2 {
      %c0_27 = arith.constant 0 : index
      %c0_28 = arith.constant 0 : index
      %60 = vector.load %arg3[%c0_27, %c0_28] : memref<2x128xf32, #tpu.memory_space<vmem>>, vector<2x128xf32>
      %c0_29 = arith.constant 0 : index
      %c0_30 = arith.constant 0 : index
      %61 = vector.load %arg8[%c0_29, %c0_30] : memref<2x128xf32, #tpu.memory_space<vmem>>, vector<2x128xf32>
      tpu.vector_store %arg8[%c0_29, %c0_30], %60 {strides = array<i32>} : memref<2x128xf32, #tpu.memory_space<vmem>>, vector<2x128xf32>,
    } else {
    }
    %c0 = arith.constant 0 : index
    %c0_1 = arith.constant 0 : index
    %c0_2 = arith.constant 0 : index
    %3 = vector.load %arg1[%c0, %c0_1, %c0_2] : memref<1x2x16xf32, #tpu.memory_space<vmem>>, vector<1x2x16xf32>
    %4 = vector.shape_cast %3 : vector<1x2x16xf32> to vector<2x16xf32>
    %c0_3 = arith.constant 0 : index
    %c0_4 = arith.constant 0 : index
    %5 = vector.load %arg8[%c0_3, %c0_4] : memref<2x128xf32, #tpu.memory_space<vmem>>, vector<2x128xf32>
    %6 = vector.extract_strided_slice %5 {offsets = [0, 0], sizes = [2, 32], strides = [1, 1]} : vector<2x128xf32> to vector<2x32xf32>
    %7 = vector.extract_strided_slice %5 {offsets = [0, 64], sizes = [2, 32], strides = [1, 1]} : vector<2x128xf32> to vector<2x32xf32>
    %c0_5 = arith.constant 0 : index
    %c0_6 = arith.constant 0 : index
    %8 = vector.load %arg2[%c0_5, %c0_6] : memref<2x128xf32, #tpu.memory_space<vmem>>, vector<2x128xf32>
    %c0_7 = arith.constant 0 : index
    %c0_8 = arith.constant 0 : index
    %9 = vector.load %arg4[%c0_7, %c0_8] : memref<16x128xf32, #tpu.memory_space<vmem>>, vector<16x128xf32>
    %cst = arith.constant dense<0.000000e+00> : vector<2x128xf32>
    %10 = tpu.matmul %4, %9, %cst {dimension_numbers = #tpu.dot_dimension_numbers<[1], [0], [0], [1], [0, 0, 1, 1], [], []>} : vector<2x16xf32>, vector<16x128xf32>, vector<2x128xf32> -> vector<2x128xf32>
    %11 = arith.addf %8, %10 : vector<2x128xf32>
    %c0_9 = arith.constant 0 : index
    %c0_10 = arith.constant 0 : index
    %c0_11 = arith.constant 0 : index
    %12 = vector.load %arg5[%c0_9, %c0_10, %c0_11] : memref<2x32x128xf32, #tpu.memory_space<vmem>>, vector<1x32x128xf32>
    %13 = vector.shape_cast %12 : vector<1x32x128xf32> to vector<32x128xf32>
    %cst_12 = arith.constant dense<0.000000e+00> : vector<2x128xf32>
    %14 = tpu.matmul %6, %13, %cst_12 {dimension_numbers = #tpu.dot_dimension_numbers<[1], [0], [0], [1], [0, 0, 1, 1], [], []>} : vector<2x32xf32>, vector<32x128xf32>, vector<2x128xf32> -> vector<2x128xf32>
    %15 = arith.addf %11, %14 : vector<2x128xf32>
    %16 = arith.negf %15 : vector<2x128xf32>
    %17 = math.exp %16 : vector<2x128xf32>
    %cst_13 = arith.constant 1.000000e+00 : f32
    %18 = vector.broadcast %cst_13 : f32 to vector<2x128xf32>
    %19 = arith.addf %18, %17 : vector<2x128xf32>
    %20 = arith.divf %18, %19 : vector<2x128xf32>
    %21 = math.tanh %15 : vector<2x128xf32>
    %22 = vector.extract_strided_slice %20 {offsets = [0, 0], sizes = [2, 32], strides = [1, 1]} : vector<2x128xf32> to vector<2x32xf32>
    %23 = vector.extract_strided_slice %20 {offsets = [0, 32], sizes = [2, 32], strides = [1, 1]} : vector<2x128xf32> to vector<2x32xf32>
    %24 = vector.extract_strided_slice %21 {offsets = [0, 64], sizes = [2, 32], strides = [1, 1]} : vector<2x128xf32> to vector<2x32xf32>
    %25 = vector.extract_strided_slice %20 {offsets = [0, 96], sizes = [2, 32], strides = [1, 1]} : vector<2x128xf32> to vector<2x32xf32>
    %26 = arith.mulf %23, %7 : vector<2x32xf32>
    %27 = arith.mulf %22, %24 : vector<2x32xf32>
    %28 = arith.addf %26, %27 : vector<2x32xf32>
    %29 = math.tanh %28 : vector<2x32xf32>
    %30 = arith.mulf %25, %29 : vector<2x32xf32>
    %31 = vector.extract_strided_slice %5 {offsets = [0, 32], sizes = [2, 32], strides = [1, 1]} : vector<2x128xf32> to vector<2x32xf32>
    %32 = vector.extract_strided_slice %5 {offsets = [0, 96], sizes = [2, 32], strides = [1, 1]} : vector<2x128xf32> to vector<2x32xf32>
    %c0_14 = arith.constant 0 : index
    %c0_15 = arith.constant 0 : index
    %c0_16 = arith.constant 0 : index
    %33 = vector.load %arg6[%c0_14, %c0_15, %c0_16] : memref<1x32x128xf32, #tpu.memory_space<vmem>>, vector<1x32x128xf32>
    %34 = vector.shape_cast %33 : vector<1x32x128xf32> to vector<32x128xf32>
    %cst_17 = arith.constant dense<0.000000e+00> : vector<2x128xf32>
    %35 = tpu.matmul %30, %34, %cst_17 {dimension_numbers = #tpu.dot_dimension_numbers<[1], [0], [0], [1], [0, 0, 1, 1], [], []>} : vector<2x32xf32>, vector<32x128xf32>, vector<2x128xf32> -> vector<2x128xf32>
    %c1 = arith.constant 1 : index
    %c0_18 = arith.constant 0 : index
    %c0_19 = arith.constant 0 : index
    %36 = vector.load %arg5[%c1, %c0_18, %c0_19] : memref<2x32x128xf32, #tpu.memory_space<vmem>>, vector<1x32x128xf32>
    %37 = vector.shape_cast %36 : vector<1x32x128xf32> to vector<32x128xf32>
    %cst_20 = arith.constant dense<0.000000e+00> : vector<2x128xf32>
    %38 = tpu.matmul %31, %37, %cst_20 {dimension_numbers = #tpu.dot_dimension_numbers<[1], [0], [0], [1], [0, 0, 1, 1], [], []>} : vector<2x32xf32>, vector<32x128xf32>, vector<2x128xf32> -> vector<2x128xf32>
    %39 = arith.addf %35, %38 : vector<2x128xf32>
    %40 = arith.negf %39 : vector<2x128xf32>
    %41 = math.exp %40 : vector<2x128xf32>
    %cst_21 = arith.constant 1.000000e+00 : f32
    %42 = vector.broadcast %cst_21 : f32 to vector<2x128xf32>
    %43 = arith.addf %42, %41 : vector<2x128xf32>
    %44 = arith.divf %42, %43 : vector<2x128xf32>
    %45 = math.tanh %39 : vector<2x128xf32>
    %46 = vector.extract_strided_slice %44 {offsets = [0, 0], sizes = [2, 32], strides = [1, 1]} : vector<2x128xf32> to vector<2x32xf32>
    %47 = vector.extract_strided_slice %44 {offsets = [0, 32], sizes = [2, 32], strides = [1, 1]} : vector<2x128xf32> to vector<2x32xf32>
    %48 = vector.extract_strided_slice %45 {offsets = [0, 64], sizes = [2, 32], strides = [1, 1]} : vector<2x128xf32> to vector<2x32xf32>
    %49 = vector.extract_strided_slice %44 {offsets = [0, 96], sizes = [2, 32], strides = [1, 1]} : vector<2x128xf32> to vector<2x32xf32>
    %50 = arith.mulf %47, %32 : vector<2x32xf32>
    %51 = arith.mulf %46, %48 : vector<2x32xf32>
    %52 = arith.addf %50, %51 : vector<2x32xf32>
    %53 = math.tanh %52 : vector<2x32xf32>
    %54 = arith.mulf %49, %53 : vector<2x32xf32>
    %c0_22 = arith.constant 0 : index
    %c0_23 = arith.constant 0 : index
    %c0_24 = arith.constant 0 : index
    %55 = vector.load %arg7[%c0_22, %c0_23, %c0_24] : memref<1x2x32xf32, #tpu.memory_space<vmem>>, vector<1x2x32xf32>
    %56 = vector.shape_cast %55 : vector<1x2x32xf32> to vector<2x32xf32>
    %57 = vector.shape_cast %54 : vector<2x32xf32> to vector<1x2x32xf32>
    tpu.vector_store %arg7[%c0_22, %c0_23, %c0_24], %57 {strides = array<i32>} : memref<1x2x32xf32, #tpu.memory_space<vmem>>, vector<1x2x32xf32>,
    %58 = tpu.concatenate %30, %54, %28, %52 in 1 : vector<2x32xf32>, vector<2x32xf32>, vector<2x32xf32>, vector<2x32xf32> -> vector<2x128xf32>
    %c0_25 = arith.constant 0 : index
    %c0_26 = arith.constant 0 : index
    %59 = vector.load %arg8[%c0_25, %c0_26] : memref<2x128xf32, #tpu.memory_space<vmem>>, vector<2x128xf32>
    tpu.vector_store %arg8[%c0_25, %c0_26], %58 {strides = array<i32>} : memref<2x128xf32, #tpu.memory_space<vmem>>, vector<2x128xf32>,
    return
  }
  func.func @transform_0(%arg0: i32) -> (i32, i32, i32) {
    %c0_i32 = arith.constant 0 : i32
    %c0_i32_0 = arith.constant 0 : i32
    %c0_i32_1 = arith.constant 0 : i32
    return %arg0, %c0_i32, %c0_i32_0 : i32, i32, i32
  }
  func.func @transform_1(%arg0: i32) -> (i32, i32) {
    %c0_i32 = arith.constant 0 : i32
    %c0_i32_0 = arith.constant 0 : i32
    %c0_i32_1 = arith.constant 0 : i32
    return %c0_i32, %c0_i32_0 : i32, i32
  }
  func.func @transform_2(%arg0: i32) -> (i32, i32) {
    %c0_i32 = arith.constant 0 : i32
    %c0_i32_0 = arith.constant 0 : i32
    %c0_i32_1 = arith.constant 0 : i32
    return %c0_i32, %c0_i32_0 : i32, i32
  }
  func.func @transform_3(%arg0: i32) -> (i32, i32) {
    %c0_i32 = arith.constant 0 : i32
    %c0_i32_0 = arith.constant 0 : i32
    %c0_i32_1 = arith.constant 0 : i32
    return %c0_i32, %c0_i32_0 : i32, i32
  }
  func.func @transform_4(%arg0: i32) -> (i32, i32, i32) {
    %c0_i32 = arith.constant 0 : i32
    %c0_i32_0 = arith.constant 0 : i32
    %c0_i32_1 = arith.constant 0 : i32
    %c0_i32_2 = arith.constant 0 : i32
    return %c0_i32, %c0_i32_0, %c0_i32_1 : i32, i32, i32
  }
  func.func @transform_5(%arg0: i32) -> (i32, i32, i32) {
    %c0_i32 = arith.constant 0 : i32
    %c0_i32_0 = arith.constant 0 : i32
    %c0_i32_1 = arith.constant 0 : i32
    %c0_i32_2 = arith.constant 0 : i32
    return %c0_i32, %c0_i32_0, %c0_i32_1 : i32, i32, i32
  }
  func.func @transform_6(%arg0: i32) -> (i32, i32, i32) {
    %c0_i32 = arith.constant 0 : i32
    %c0_i32_0 = arith.constant 0 : i32
    %c0_i32_1 = arith.constant 0 : i32
    return %arg0, %c0_i32, %c0_i32_0 : i32, i32, i32
  }
  func.func @transform_7(%arg0: i32) -> (i32, i32) {
    %c0_i32 = arith.constant 0 : i32
    %c0_i32_0 = arith.constant 0 : i32
    %c0_i32_1 = arith.constant 0 : i32
    return %c0_i32, %c0_i32_0 : i32, i32
  }
}

</mosaic_0001>

<llo_original>
// kernel: tpu_custom_call.1
$region0: #{tpu_custom_call.1}
  #allocation0 [shape = 'u32[]', space=smem, size = 0x4, offset = 0x4, fixed_abs, tag = 'smem constant byte address 0x4 - core index']
  #allocation1 [shape = 'u32[144,128]{1,0:T(1,128)}', space=vmem, size = 0x12000, scoped, tag = 'internal scratch']
  %s0 = inlined_call_operand.vmem [shape: f32[1,2,16], index: 0, kind: input, shape index: {}]
  %s1 = inlined_call_operand.vmem [shape: f32[2,128], index: 1, kind: input, shape index: {}]
  %s2 = inlined_call_operand.hbm [shape: f32[2,128], index: 2, kind: input, shape index: {}, may-alias: {2,7}]
  %s3 = inlined_call_operand.hbm [shape: f32[16,128], index: 3, kind: input, shape index: {}]
  %s4 = inlined_call_operand.hbm [shape: f32[2,32,128], index: 4, kind: input, shape index: {}]
  %s5 = inlined_call_operand.hbm [shape: f32[1,32,128], index: 5, kind: input, shape index: {}]
  %s6 = inlined_call_operand.hbm [shape: f32[1,2,32], index: 6, kind: output, shape index: {0}]
  %s7 = inlined_call_operand.hbm [shape: f32[2,128], index: 7, kind: output, shape index: {1}, may-alias: {2,7}]
  %8 = xla_tuple %s6, %s7
  %s9 = sld [smem:[#allocation0]]
  $region62: #{tpu_custom_call.1} parent=0
    _
  %s11 = ssub.s32 1, %s9
  %s12 = scalar_select 0, %s11, %s9
  $region1: #{tpu_custom_call.1} parent=0
    #allocation2 [shape = 'u8[1024]{0}', space=vmem, size = 0x400, scoped, tag = 'input window, operand 2, single buffered']
    #allocation3 [shape = 's32[1]{0}', space=sflag, size = 0x4, scoped, tag = 'scoped memory for tpu_custom_call.1']
    #allocation4 [shape = 's32[1]{0}', space=sflag, size = 0x4, scoped, tag = 'scoped memory for tpu_custom_call.1']
    #allocation5 [shape = 'u8[8192]{0}', space=vmem, size = 0x2000, scoped, tag = 'input window, operand 3, single buffered']
    #allocation6 [shape = 's32[1]{0}', space=sflag, size = 0x4, scoped, tag = 'scoped memory for tpu_custom_call.1']
    #allocation7 [shape = 'u8[32768]{0}', space=vmem, size = 0x8000, scoped, tag = 'input window, operand 4, single buffered']
    #allocation8 [shape = 'u8[16384]{0}', space=vmem, size = 0x4000, scoped, tag = 'input window, operand 5, single buffered']
    #allocation9 [shape = 's32[1]{0}', space=sflag, size = 0x4, scoped, tag = 'scoped memory for tpu_custom_call.1']
    #allocation10 [shape = 'u8[1024]{0}', space=vmem, size = 0x400, scoped, tag = 'output window, operand 0, single buffered']
    #allocation11 [shape = 'u8[1024]{0}', space=vmem, size = 0x400, scoped, tag = 'output window, operand 1, single buffered']
    #allocation12 [shape = 's32[1]{0}', space=sflag, size = 0x4, scoped, tag = 'scoped memory for tpu_custom_call.1']
    %13 = vsyncpa [#allocation3], 0
    %14 = vsyncpa [#allocation6], 0
    %15 = vsyncpa [#allocation9], 0
    %16 = vsyncpa [#allocation4], 0
    %17 = vsyncpa [#allocation12], 0
    // Predicated region
    $region2: #{tpu_custom_call.1} parent=1 // pred_check
      _
    $region3: #{tpu_custom_call.1} parent=1 // pred_check_branch
      %19 = sbr.rel (0) target = $region5
    $region4: #{tpu_custom_call.1} parent=1 // pred_region
      _
    $region5: #{tpu_custom_call.1} parent=1 // pred_fallthru
      _
    // Predicated region
    $region6: #{tpu_custom_call.1} parent=1 // pred_check
      _
    $region7: #{tpu_custom_call.1} parent=1 // pred_check_branch
      %21 = sbr.rel (0) target = $region9
    $region8: #{tpu_custom_call.1} parent=1 // pred_region
      _
    $region9: #{tpu_custom_call.1} parent=1 // pred_fallthru
      _
    // Predicated region
    $region10: #{tpu_custom_call.1} parent=1 // pred_check
      _
    $region11: #{tpu_custom_call.1} parent=1 // pred_check_branch
      %23 = sbr.rel (0) target = $region13
    $region12: #{tpu_custom_call.1} parent=1 // pred_region
      %s25 = ssub.s32 32, 32
      %26 = vsyncadd [#allocation3], %s25
      %s28 = sshll.u32 [#allocation2], 4
      %s29 = int_to_ptr.vmem [resolvable:$true] %s28
      %31 = dma.hbm_to_vmem [thread:$0]  %s2, 32, %s29, [#allocation3]
    $region13: #{tpu_custom_call.1} parent=1 // pred_fallthru
      _
    // Predicated region
    $region14: #{tpu_custom_call.1} parent=1 // pred_check
      _
    $region15: #{tpu_custom_call.1} parent=1 // pred_check_branch
      %33 = sbr.rel (0) target = $region17
    $region16: #{tpu_custom_call.1} parent=1 // pred_region
      %s35 = ssub.s32 256, 256
      %36 = vsyncadd [#allocation6], %s35
      %s37 = sshll.u32 [#allocation5], 4
      %s38 = int_to_ptr.vmem [resolvable:$true] %s37
      %43 = dma.hbm_to_vmem [thread:$0]  %s3, 256, %s38, [#allocation6], 128, 128, 8
    $region17: #{tpu_custom_call.1} parent=1 // pred_fallthru
      _
    // Predicated region
    $region18: #{tpu_custom_call.1} parent=1 // pred_check
      _
    $region19: #{tpu_custom_call.1} parent=1 // pred_check_branch
      %45 = sbr.rel (0) target = $region21
    $region20: #{tpu_custom_call.1} parent=1 // pred_region
      %s47 = ssub.s32 1024, 1024
      %48 = vsyncadd [#allocation6], %s47
      %s49 = sshll.u32 [#allocation7], 4
      %s50 = int_to_ptr.vmem [resolvable:$true] %s49
      %55 = dma.hbm_to_vmem [thread:$0]  %s4, 1024, %s50, [#allocation6], 128, 128, 8
    $region21: #{tpu_custom_call.1} parent=1 // pred_fallthru
      _
    // Predicated region
    $region22: #{tpu_custom_call.1} parent=1 // pred_check
      _
    $region23: #{tpu_custom_call.1} parent=1 // pred_check_branch
      %57 = sbr.rel (0) target = $region25
    $region24: #{tpu_custom_call.1} parent=1 // pred_region
      %s59 = ssub.s32 512, 512
      %60 = vsyncadd [#allocation9], %s59
      %s61 = sshll.u32 [#allocation8], 4
      %s62 = int_to_ptr.vmem [resolvable:$true] %s61
      %67 = dma.hbm_to_vmem [thread:$0]  %s5, 512, %s62, [#allocation9], 128, 128, 8
    $region25: #{tpu_custom_call.1} parent=1 // pred_fallthru
      _
    // Predicated region
    $region26: #{tpu_custom_call.1} parent=1 // pred_check
      _
    $region27: #{tpu_custom_call.1} parent=1 // pred_check_branch
      %69 = sbr.rel (0) target = $region29
    $region28: #{tpu_custom_call.1} parent=1 // pred_region
      %70 = dma.done [#allocation3], 32
    $region29: #{tpu_custom_call.1} parent=1 // pred_fallthru
      _
    // Predicated region
    $region30: #{tpu_custom_call.1} parent=1 // pred_check
      _
    $region31: #{tpu_custom_call.1} parent=1 // pred_check_branch
      %72 = sbr.rel (0) target = $region33
    $region32: #{tpu_custom_call.1} parent=1 // pred_region
      %73 = dma.done [#allocation6], 256
    $region33: #{tpu_custom_call.1} parent=1 // pred_fallthru
      _
    // Predicated region
    $region34: #{tpu_custom_call.1} parent=1 // pred_check
      _
    $region35: #{tpu_custom_call.1} parent=1 // pred_check_branch
      %75 = sbr.rel (0) target = $region37
    $region36: #{tpu_custom_call.1} parent=1 // pred_region
      %76 = dma.done [#allocation6], 1024
    $region37: #{tpu_custom_call.1} parent=1 // pred_fallthru
      _
    // Predicated region
    $region38: #{tpu_custom_call.1} parent=1 // pred_check
      _
    $region39: #{tpu_custom_call.1} parent=1 // pred_check_branch
      %78 = sbr.rel (0) target = $region41
    $region40: #{tpu_custom_call.1} parent=1 // pred_region
      %79 = dma.done [#allocation9], 512
    $region41: #{tpu_custom_call.1} parent=1 // pred_fallthru
      _
    %p80 = scmp.eq.s32.totalorder 0, 0
    // Predicated region
    $region42: #{tpu_custom_call.1} parent=1 // pred_check
      %p81 = pneg %p80
    $region43: #{tpu_custom_call.1} parent=1 // pred_check_branch
      %83 = sbr.rel (%p81) target = $region45
    $region44: #{tpu_custom_call.1} parent=1 // pred_region
      %v84 = vld [vmem:[#allocation2] sm:$0x3]
      %85 = vst [vmem:[#allocation11] sm:$0x3] %v84
    $region45: #{tpu_custom_call.1} parent=1 // pred_fallthru
      _
    %v86 = vld [vmem:[%s0] sm:$0x3]
    %v87 = vld [vmem:[#allocation11] sm:$0x3]
    %v88 = vld [vmem:[%s1] sm:$0x3]
    %v89 = vld [vmem:[#allocation5] sm:$0xff]
    %v90 = vld [vmem:[#allocation5 + $0x8] sm:$0xff]
    %vm91 = vcmask 130048
    %v93 = vsel %vm91, %v86, 0
    %95 = vmatprep.subr.mxu0 0.0
    %96 = vmatpush1.msra.mxu0 %v89
    %97 = vmatprep.subr.mxu0 0.0
    %98 = vmatpush1.msra.mxu0 %v90
    %99 = vmatprep.subr.mxu0 0.0
    %100 = vmatpush1.msra.mxu0 0.0
    %101 = vmatprep.subr.mxu0 0.0
    %102 = vmatpush1.msra.mxu0 0.0
    %103 = vmatprep.subr.mxu0 0.0
    %104 = vmatpush1.msra.mxu0 0.0
    %105 = vmatprep.subr.mxu0 0.0
    %106 = vmatpush1.msra.mxu0 0.0
    %107 = vmatprep.subr.mxu0 0.0
    %108 = vmatpush1.msra.mxu0 0.0
    %109 = vmatprep.subr.mxu0 0.0
    %110 = vmatpush1.msra.mxu0 0.0
    %111 = vmatprep.subr.mxu0 0.0
    %112 = vmatpush1.msra.mxu0 0.0
    %113 = vmatprep.subr.mxu0 0.0
    %114 = vmatpush1.msra.mxu0 0.0
    %115 = vmatprep.subr.mxu0 0.0
    %116 = vmatpush1.msra.mxu0 0.0
    %117 = vmatprep.subr.mxu0 0.0
    %118 = vmatpush1.msra.mxu0 0.0
    %119 = vmatprep.subr.mxu0 0.0
    %120 = vmatpush1.msra.mxu0 0.0
    %121 = vmatprep.subr.mxu0 0.0
    %122 = vmatpush1.msra.mxu0 0.0
    %123 = vmatprep.subr.mxu0 0.0
    %124 = vmatpush1.msra.mxu0 0.0
    %125 = vmatprep.subr.mxu0 0.0
    %126 = vmatpush1.msra.mxu0 0.0
    %127 = vmatprep.subr.mxu0 0.0
    %128 = vmatpush1.msra.mxu0 0.0
    %129 = vmatprep.subr.mxu0 0.0
    %130 = vmatpush1.msra.mxu0 0.0
    %131 = vmatprep.subr.mxu0 0.0
    %132 = vmatpush1.msra.mxu0 0.0
    %133 = vmatprep.subr.mxu0 0.0
    %134 = vmatpush1.msra.mxu0 0.0
    %135 = vmatprep.subr.mxu0 0.0
    %136 = vmatpush1.msra.mxu0 0.0
    %137 = vmatprep.subr.mxu0 0.0
    %138 = vmatpush1.msra.mxu0 0.0
    %139 = vmatprep.subr.mxu0 0.0
    %140 = vmatpush1.msra.mxu0 0.0
    %141 = vmatprep.subr.mxu0 0.0
    %142 = vmatpush1.msra.mxu0 0.0
    %143 = vmatprep.subr.mxu0 0.0
    %144 = vmatpush1.msra.mxu0 0.0
    %145 = vmatprep.subr.mxu0 0.0
    %146 = vmatpush1.msra.mxu0 0.0
    %147 = vmatprep.subr.mxu0 0.0
    %148 = vmatpush1.msra.mxu0 0.0
    %149 = vmatprep.subr.mxu0 0.0
    %150 = vmatpush1.msra.mxu0 0.0
    %151 = vmatprep.subr.mxu0 0.0
    %152 = vmatpush1.msra.mxu0 0.0
    %153 = vmatprep.subr.mxu0 0.0
    %154 = vmatpush1.msra.mxu0 0.0
    %155 = vmatprep.subr.mxu0 0.0
    %156 = vmatpush1.msra.mxu0 0.0
    %157 = vmatprep.subr.mxu0 0.0
    %158 = vmatpush1.msra.mxu0 0.0
    %159 = vmatprep.mubr.f32.mxu0 0.0
    %160 = vmatmul.mubr.f32.gmra.mrb[0].mxu0 %v93
    %v161 = vpop.f32.mrb[0].mxu0
    %v162 = vadd.f32 0.0, %v161
    %v163 = vpop.f32.mrb[0].mxu0
    %164 = vdwg.mxu0
    %v165 = vadd.f32 %v88, %v162
    %v166 = vld [vmem:[#allocation7] sm:$0xff]
    %v167 = vld [vmem:[#allocation7 + $0x8] sm:$0xff]
    %v168 = vld [vmem:[#allocation7 + $0x10] sm:$0xff]
    %v169 = vld [vmem:[#allocation7 + $0x18] sm:$0xff]
    %vm170 = vcmask 261120
    %v172 = vsel %vm170, %v87, 0
    %174 = vmatprep.subr.mxu0 0.0
    %175 = vmatpush1.msra.mxu0 %v166
    %176 = vmatprep.subr.mxu0 0.0
    %177 = vmatpush1.msra.mxu0 %v167
    %178 = vmatprep.subr.mxu0 0.0
    %179 = vmatpush1.msra.mxu0 %v168
    %180 = vmatprep.subr.mxu0 0.0
    %181 = vmatpush1.msra.mxu0 %v169
    %182 = vmatprep.subr.mxu0 0.0
    %183 = vmatpush1.msra.mxu0 0.0
    %184 = vmatprep.subr.mxu0 0.0
    %185 = vmatpush1.msra.mxu0 0.0
    %186 = vmatprep.subr.mxu0 0.0
    %187 = vmatpush1.msra.mxu0 0.0
    %188 = vmatprep.subr.mxu0 0.0
    %189 = vmatpush1.msra.mxu0 0.0
    %190 = vmatprep.subr.mxu0 0.0
    %191 = vmatpush1.msra.mxu0 0.0
    %192 = vmatprep.subr.mxu0 0.0
    %193 = vmatpush1.msra.mxu0 0.0
    %194 = vmatprep.subr.mxu0 0.0
    %195 = vmatpush1.msra.mxu0 0.0
    %196 = vmatprep.subr.mxu0 0.0
    %197 = vmatpush1.msra.mxu0 0.0
    %198 = vmatprep.subr.mxu0 0.0
    %199 = vmatpush1.msra.mxu0 0.0
    %200 = vmatprep.subr.mxu0 0.0
    %201 = vmatpush1.msra.mxu0 0.0
    %202 = vmatprep.subr.mxu0 0.0
    %203 = vmatpush1.msra.mxu0 0.0
    %204 = vmatprep.subr.mxu0 0.0
    %205 = vmatpush1.msra.mxu0 0.0
    %206 = vmatprep.subr.mxu0 0.0
    %207 = vmatpush1.msra.mxu0 0.0
    %208 = vmatprep.subr.mxu0 0.0
    %209 = vmatpush1.msra.mxu0 0.0
    %210 = vmatprep.subr.mxu0 0.0
    %211 = vmatpush1.msra.mxu0 0.0
    %212 = vmatprep.subr.mxu0 0.0
    %213 = vmatpush1.msra.mxu0 0.0
    %214 = vmatprep.subr.mxu0 0.0
    %215 = vmatpush1.msra.mxu0 0.0
    %216 = vmatprep.subr.mxu0 0.0
    %217 = vmatpush1.msra.mxu0 0.0
    %218 = vmatprep.subr.mxu0 0.0
    %219 = vmatpush1.msra.mxu0 0.0
    %220 = vmatprep.subr.mxu0 0.0
    %221 = vmatpush1.msra.mxu0 0.0
    %222 = vmatprep.subr.mxu0 0.0
    %223 = vmatpush1.msra.mxu0 0.0
    %224 = vmatprep.subr.mxu0 0.0
    %225 = vmatpush1.msra.mxu0 0.0
    %226 = vmatprep.subr.mxu0 0.0
    %227 = vmatpush1.msra.mxu0 0.0
    %228 = vmatprep.subr.mxu0 0.0
    %229 = vmatpush1.msra.mxu0 0.0
    %230 = vmatprep.subr.mxu0 0.0
    %231 = vmatpush1.msra.mxu0 0.0
    %232 = vmatprep.subr.mxu0 0.0
    %233 = vmatpush1.msra.mxu0 0.0
    %234 = vmatprep.subr.mxu0 0.0
    %235 = vmatpush1.msra.mxu0 0.0
    %236 = vmatprep.subr.mxu0 0.0
    %237 = vmatpush1.msra.mxu0 0.0
    %238 = vmatprep.mubr.f32.mxu0 0.0
    %239 = vmatmul.mubr.f32.gmra.mrb[0].mxu0 %v172
    %v240 = vpop.f32.mrb[0].mxu0
    %v241 = vadd.f32 0.0, %v240
    %v242 = vpop.f32.mrb[0].mxu0
    %243 = vdwg.mxu0
    %v244 = vadd.f32 %v165, %v241
    %v245 = vxor.u32 %v244, 2147483648
    %v246 = vmul.f32 %v245, 1.442695
    %v247 = vpow.pop %v246
    %v248 = vadd.f32 %v247, 1.0
    %v249 = vrcp.pop %v248
    %v250 = vmul.f32 1.0, %v249
    %v251 = vtanh.pop %v244
    %252 = vrot.lane.b32.xlu0 %v87, 96
    %v253 = vpop.permute.xlu0 %252
    %v255 = vmul.f32 %v250, %v253
    %257 = vrot.lane.b32.xlu0 %v251, 64
    %v258 = vpop.permute.xlu0 %257
    %v260 = vmul.f32 %v250, %v258
    %262 = vrot.lane.b32.xlu0 %v260, 32
    %v263 = vpop.permute.xlu0 %262
    %v265 = vadd.f32 %v255, %v263
    %v266 = vtanh.pop %v265
    %268 = vrot.lane.b32.xlu0 %v266, 64
    %v269 = vpop.permute.xlu0 %268
    %v271 = vmul.f32 %v250, %v269
    %v272 = vld [vmem:[#allocation8] sm:$0xff]
    %v273 = vld [vmem:[#allocation8 + $0x8] sm:$0xff]
    %v274 = vld [vmem:[#allocation8 + $0x10] sm:$0xff]
    %v275 = vld [vmem:[#allocation8 + $0x18] sm:$0xff]
    %s276 = scalar_lea.vmem [#allocation7], 32
    %v277 = vld [vmem:[%s276] sm:$0xff]
    %v278 = vld [vmem:[%s276 + $0x8] sm:$0xff]
    %v279 = vld [vmem:[%s276 + $0x10] sm:$0xff]
    %v280 = vld [vmem:[%s276 + $0x18] sm:$0xff]
    %v281 = vsel %vm170, %v253, 0
    %283 = vmatprep.subr.mxu0 0.0
    %284 = vmatpush1.msra.mxu0 %v277
    %285 = vmatprep.subr.mxu0 0.0
    %286 = vmatpush1.msra.mxu0 %v278
    %287 = vmatprep.subr.mxu0 0.0
    %288 = vmatpush1.msra.mxu0 %v279
    %289 = vmatprep.subr.mxu0 0.0
    %290 = vmatpush1.msra.mxu0 %v280
    %291 = vmatprep.subr.mxu0 0.0
    %292 = vmatpush1.msra.mxu0 0.0
    %293 = vmatprep.subr.mxu0 0.0
    %294 = vmatpush1.msra.mxu0 0.0
    %295 = vmatprep.subr.mxu0 0.0
    %296 = vmatpush1.msra.mxu0 0.0
    %297 = vmatprep.subr.mxu0 0.0
    %298 = vmatpush1.msra.mxu0 0.0
    %299 = vmatprep.subr.mxu0 0.0
    %300 = vmatpush1.msra.mxu0 0.0
    %301 = vmatprep.subr.mxu0 0.0
    %302 = vmatpush1.msra.mxu0 0.0
    %303 = vmatprep.subr.mxu0 0.0
    %304 = vmatpush1.msra.mxu0 0.0
    %305 = vmatprep.subr.mxu0 0.0
    %306 = vmatpush1.msra.mxu0 0.0
    %307 = vmatprep.subr.mxu0 0.0
    %308 = vmatpush1.msra.mxu0 0.0
    %309 = vmatprep.subr.mxu0 0.0
    %310 = vmatpush1.msra.mxu0 0.0
    %311 = vmatprep.subr.mxu0 0.0
    %312 = vmatpush1.msra.mxu0 0.0
    %313 = vmatprep.subr.mxu0 0.0
    %314 = vmatpush1.msra.mxu0 0.0
    %315 = vmatprep.subr.mxu0 0.0
    %316 = vmatpush1.msra.mxu0 0.0
    %317 = vmatprep.subr.mxu0 0.0
    %318 = vmatpush1.msra.mxu0 0.0
    %319 = vmatprep.subr.mxu0 0.0
    %320 = vmatpush1.msra.mxu0 0.0
    %321 = vmatprep.subr.mxu0 0.0
    %322 = vmatpush1.msra.mxu0 0.0
    %323 = vmatprep.subr.mxu0 0.0
    %324 = vmatpush1.msra.mxu0 0.0
    %325 = vmatprep.subr.mxu0 0.0
    %326 = vmatpush1.msra.mxu0 0.0
    %327 = vmatprep.subr.mxu0 0.0
    %328 = vmatpush1.msra.mxu0 0.0
    %329 = vmatprep.subr.mxu0 0.0
    %330 = vmatpush1.msra.mxu0 0.0
    %331 = vmatprep.subr.mxu0 0.0
    %332 = vmatpush1.msra.mxu0 0.0
    %333 = vmatprep.subr.mxu0 0.0
    %334 = vmatpush1.msra.mxu0 0.0
    %335 = vmatprep.subr.mxu0 0.0
    %336 = vmatpush1.msra.mxu0 0.0
    %337 = vmatprep.subr.mxu0 0.0
    %338 = vmatpush1.msra.mxu0 0.0
    %339 = vmatprep.subr.mxu0 0.0
    %340 = vmatpush1.msra.mxu0 0.0
    %341 = vmatprep.subr.mxu0 0.0
    %342 = vmatpush1.msra.mxu0 0.0
    %343 = vmatprep.subr.mxu0 0.0
    %344 = vmatpush1.msra.mxu0 0.0
    %345 = vmatprep.subr.mxu0 0.0
    %346 = vmatpush1.msra.mxu0 0.0
    %347 = vmatprep.mubr.f32.mxu0 0.0
    %348 = vmatmul.mubr.f32.gmra.mrb[0].mxu0 %v281
    %v349 = vpop.f32.mrb[0].mxu0
    %v350 = vadd.f32 0.0, %v349
    %v351 = vpop.f32.mrb[0].mxu0
    %352 = vdwg.mxu0
    %354 = vrot.lane.b32.xlu0 %v271, 32
    %v355 = vpop.permute.xlu0 %354
    %v356 = vsel %vm170, %v355, 0
    %358 = vmatprep.subr.mxu0 0.0
    %359 = vmatpush1.msra.mxu0 %v272
    %360 = vmatprep.subr.mxu0 0.0
    %361 = vmatpush1.msra.mxu0 %v273
    %362 = vmatprep.subr.mxu0 0.0
    %363 = vmatpush1.msra.mxu0 %v274
    %364 = vmatprep.subr.mxu0 0.0
    %365 = vmatpush1.msra.mxu0 %v275
    %366 = vmatprep.subr.mxu0 0.0
    %367 = vmatpush1.msra.mxu0 0.0
    %368 = vmatprep.subr.mxu0 0.0
    %369 = vmatpush1.msra.mxu0 0.0
    %370 = vmatprep.subr.mxu0 0.0
    %371 = vmatpush1.msra.mxu0 0.0
    %372 = vmatprep.subr.mxu0 0.0
    %373 = vmatpush1.msra.mxu0 0.0
    %374 = vmatprep.subr.mxu0 0.0
    %375 = vmatpush1.msra.mxu0 0.0
    %376 = vmatprep.subr.mxu0 0.0
    %377 = vmatpush1.msra.mxu0 0.0
    %378 = vmatprep.subr.mxu0 0.0
    %379 = vmatpush1.msra.mxu0 0.0
    %380 = vmatprep.subr.mxu0 0.0
    %381 = vmatpush1.msra.mxu0 0.0
    %382 = vmatprep.subr.mxu0 0.0
    %383 = vmatpush1.msra.mxu0 0.0
    %384 = vmatprep.subr.mxu0 0.0
    %385 = vmatpush1.msra.mxu0 0.0
    %386 = vmatprep.subr.mxu0 0.0
    %387 = vmatpush1.msra.mxu0 0.0
    %388 = vmatprep.subr.mxu0 0.0
    %389 = vmatpush1.msra.mxu0 0.0
    %390 = vmatprep.subr.mxu0 0.0
    %391 = vmatpush1.msra.mxu0 0.0
    %392 = vmatprep.subr.mxu0 0.0
    %393 = vmatpush1.msra.mxu0 0.0
    %394 = vmatprep.subr.mxu0 0.0
    %395 = vmatpush1.msra.mxu0 0.0
    %396 = vmatprep.subr.mxu0 0.0
    %397 = vmatpush1.msra.mxu0 0.0
    %398 = vmatprep.subr.mxu0 0.0
    %399 = vmatpush1.msra.mxu0 0.0
    %400 = vmatprep.subr.mxu0 0.0
    %401 = vmatpush1.msra.mxu0 0.0
    %402 = vmatprep.subr.mxu0 0.0
    %403 = vmatpush1.msra.mxu0 0.0
    %404 = vmatprep.subr.mxu0 0.0
    %405 = vmatpush1.msra.mxu0 0.0
    %406 = vmatprep.subr.mxu0 0.0
    %407 = vmatpush1.msra.mxu0 0.0
    %408 = vmatprep.subr.mxu0 0.0
    %409 = vmatpush1.msra.mxu0 0.0
    %410 = vmatprep.subr.mxu0 0.0
    %411 = vmatpush1.msra.mxu0 0.0
    %412 = vmatprep.subr.mxu0 0.0
    %413 = vmatpush1.msra.mxu0 0.0
    %414 = vmatprep.subr.mxu0 0.0
    %415 = vmatpush1.msra.mxu0 0.0
    %416 = vmatprep.subr.mxu0 0.0
    %417 = vmatpush1.msra.mxu0 0.0
    %418 = vmatprep.subr.mxu0 0.0
    %419 = vmatpush1.msra.mxu0 0.0
    %420 = vmatprep.subr.mxu0 0.0
    %421 = vmatpush1.msra.mxu0 0.0
    %422 = vmatprep.mubr.f32.mxu0 0.0
    %423 = vmatmul.mubr.f32.gmra.mrb[0].mxu0 %v356
    %v424 = vpop.f32.mrb[0].mxu0
    %v425 = vadd.f32 %v350, %v424
    %v426 = vpop.f32.mrb[0].mxu0
    %427 = vdwg.mxu0
    %v428 = vxor.u32 %v425, 2147483648
    %v429 = vmul.f32 %v428, 1.442695
    %v430 = vpow.pop %v429
    %v431 = vadd.f32 %v430, 1.0
    %v432 = vrcp.pop %v431
    %v433 = vmul.f32 1.0, %v432
    %v434 = vtanh.pop %v425
    %435 = vrot.lane.b32.xlu0 %v87, 64
    %v436 = vpop.permute.xlu0 %435
    %v438 = vmul.f32 %v433, %v436
    %440 = vrot.lane.b32.xlu0 %v434, 64
    %v441 = vpop.permute.xlu0 %440
    %v443 = vmul.f32 %v433, %v441
    %445 = vrot.lane.b32.xlu0 %v443, 32
    %v446 = vpop.permute.xlu0 %445
    %v448 = vadd.f32 %v438, %v446
    %v449 = vtanh.pop %v448
    %451 = vrot.lane.b32.xlu0 %v449, 64
    %v452 = vpop.permute.xlu0 %451
    %v454 = vmul.f32 %v433, %v452
    %456 = vrot.lane.b32.xlu0 %v454, 32
    %v457 = vpop.permute.xlu0 %456
    %vm459 = vcmask 254976
    %460 = vst.msk [vmem:[#allocation10] sm:$0x3] %vm459, %v457
    %462 = vrot.lane.b32.xlu0 %v454, 64
    %v463 = vpop.permute.xlu0 %462
    %466 = vrot.lane.b32.xlu0 %v265, 32
    %v467 = vpop.permute.xlu0 %466
    %470 = vrot.lane.b32.xlu0 %v448, 64
    %v471 = vpop.permute.xlu0 %470
    %v473 = vsel %vm170, %v355, %v463
    %vm474 = vcmask 523264
    %v475 = vsel %vm474, %v473, %v467
    %vm476 = vcmask 785408
    %v477 = vsel %vm476, %v475, %v471
    %478 = vst [vmem:[#allocation11] sm:$0x3] %v477
    // Predicated region
    $region46: #{tpu_custom_call.1} parent=1 // pred_check
      _
    $region47: #{tpu_custom_call.1} parent=1 // pred_check_branch
      %480 = sbr.rel (0) target = $region49
    $region48: #{tpu_custom_call.1} parent=1 // pred_region
      %s482 = ssub.s32 32, 32
      %483 = vsyncadd [#allocation4], %s482
      %s485 = sshll.u32 [#allocation10], 4
      %s486 = int_to_ptr.vmem [resolvable:$true] %s485
      %488 = dma.vmem_to_hbm [thread:$0]  %s486, 32, %s6, [#allocation4]
    $region49: #{tpu_custom_call.1} parent=1 // pred_fallthru
      _
    // Predicated region
    $region50: #{tpu_custom_call.1} parent=1 // pred_check
      _
    $region51: #{tpu_custom_call.1} parent=1 // pred_check_branch
      %490 = sbr.rel (0) target = $region53
    $region52: #{tpu_custom_call.1} parent=1 // pred_region
      %s492 = ssub.s32 32, 32
      %493 = vsyncadd [#allocation12], %s492
      %s495 = sshll.u32 [#allocation11], 4
      %s496 = int_to_ptr.vmem [resolvable:$true] %s495
      %498 = dma.vmem_to_hbm [thread:$0]  %s496, 32, %s7, [#allocation12]
    $region53: #{tpu_custom_call.1} parent=1 // pred_fallthru
      _
    // Predicated region
    $region54: #{tpu_custom_call.1} parent=1 // pred_check
      _
    $region55: #{tpu_custom_call.1} parent=1 // pred_check_branch
      %500 = sbr.rel (0) target = $region57
    $region56: #{tpu_custom_call.1} parent=1 // pred_region
      %501 = dma.done [#allocation4], 32
    $region57: #{tpu_custom_call.1} parent=1 // pred_fallthru
      _
    // Predicated region
    $region58: #{tpu_custom_call.1} parent=1 // pred_check
      _
    $region59: #{tpu_custom_call.1} parent=1 // pred_check_branch
      %503 = sbr.rel (0) target = $region61
    $region60: #{tpu_custom_call.1} parent=1 // pred_region
      %504 = dma.done [#allocation12], 32
    $region61: #{tpu_custom_call.1} parent=1 // pred_fallthru
      _
    %505 = vsyncpa [#allocation3], 1
    %506 = vsyncpa [#allocation6], 1
    %507 = vsyncpa [#allocation9], 1
    %508 = vsyncpa [#allocation4], 1
    %509 = vsyncpa [#allocation12], 1

</llo_original>
